<compile_context>
chip_gen: v6e
topology: v6e:2x2x1
jax: 0.10.0
libtpu: 0.0.40
codegen_flags: <defaults>
</compile_context>

<pallas_src>
import math

import jax
import jax.numpy as jnp
from jax.experimental import pallas as pl
from jax.experimental.pallas import tpu as pltpu

LOG2 = math.log(2.0)


def _shifted_softplus_kernel(x_ref, o_ref):
    # Numerically stable, single exp + single log1p per element.
    x = x_ref[...].astype(jnp.float32)
    y = jnp.maximum(x, 0.0) + jnp.log1p(jnp.exp(-jnp.abs(x))) - LOG2
    o_ref[...] = y.astype(o_ref.dtype)


def _round_up(v, m):
    return ((v + m - 1) // m) * m


def shifted_softplus(x, *, max_block_rows=256, max_block_cols=512):
    """Pallas implementation of ShiftedSoftplus.forward (softplus(x) - log 2)."""
    orig_shape = x.shape
    orig_dtype = x.dtype

    # Flatten to 2-D [rows, cols]; the last dim maps onto the 128-wide lane axis.
    if x.ndim == 0:
        x2 = x.reshape(1, 1)
    elif x.ndim == 1:
        x2 = x.reshape(1, x.shape[0])
    else:
        x2 = x.reshape(-1, x.shape[-1])
    rows, cols = x2.shape

    # Native sublane multiple depends on dtype packing (f32: 8, bf16: 16, 8-bit: 32).
    sublane = {4: 8, 2: 16, 1: 32}.get(jnp.dtype(orig_dtype).itemsize, 8)

    # Lane-dense blocks: big tiles amortize per-grid-step overhead and keep the
    # output stores unmasked (full 128-lane vst).
    block_rows = min(_round_up(rows, sublane), max_block_rows)
    block_cols = min(_round_up(cols, 128), max_block_cols)

    pr = _round_up(rows, block_rows)
    pc = _round_up(cols, block_cols)
    if (pr, pc) != (rows, cols):
        x2 = jnp.pad(x2, ((0, pr - rows), (0, pc - cols)))

    grid = (pr // block_rows, pc // block_cols)
    spec = pl.BlockSpec((block_rows, block_cols), lambda i, j: (i, j))

    out = pl.pallas_call(
        _shifted_softplus_kernel,
        out_shape=jax.ShapeDtypeStruct((pr, pc), orig_dtype),
        grid=grid,
        in_specs=[spec],
        out_specs=spec,
        compiler_params=pltpu.CompilerParams(
            # Both axes are independent -> shard across v7x's two TensorCores.
            dimension_semantics=("parallel", "parallel"),
            # Double-buffered in+out tiles (256x512 f32) are ~2 MiB; 32 MiB
            # leaves headroom on every generation incl. v7x's 64 MiB VMEM.
            vmem_limit_bytes=32 * 1024 * 1024,
        ),
    )(x2)

    return out[:rows, :cols].reshape(orig_shape)


def reference_jax(x):
    return jax.nn.softplus(x) - LOG2


if __name__ == "__main__":
    key = jax.random.PRNGKey(0)
    # Small input consistent with an elementwise activation applied to a
    # feature tensor; scaled so both tails of softplus are exercised.
    x = 4.0 * jax.random.normal(key, (2, 4, 16, 16), jnp.float32)

    y = shifted_softplus(x)
    y = jax.block_until_ready(y)

    ref = reference_jax(x)
    assert y.shape == x.shape
    assert y.dtype == x.dtype
    assert jnp.allclose(y, ref, atol=1e-5, rtol=1e-5), "mismatch vs reference"

    print("KERNEL_OK")
</pallas_src>

<mosaic_0001>
module attributes {stable_mosaic.version = 11 : i64} {
  func.func @_shifted_softplus_kernel(%arg0: i32, %arg1: i32, %arg2: memref<128x128xf32, #tpu.memory_space<vmem>>, %arg3: memref<128x128xf32, #tpu.memory_space<vmem>>) attributes {dimension_semantics = [#tpu.dimension_semantics<parallel>, #tpu.dimension_semantics<parallel>], iteration_bounds = array<i64: 1, 1>, scalar_prefetch = 0 : i64, scratch_operands = 0 : i64, tpu.core_type = #tpu.core_type<tc>, window_params = [{transform_indices = @transform_0, window_bounds = array<i64: 128, 128>}, {transform_indices = @transform_1, window_bounds = array<i64: 128, 128>}]} {
    %c0 = arith.constant 0 : index
    %c0_0 = arith.constant 0 : index
    %0 = vector.load %arg2[%c0, %c0_0] : memref<128x128xf32, #tpu.memory_space<vmem>>, vector<128x128xf32>
    %cst = arith.constant 0.000000e+00 : f32
    %1 = vector.broadcast %cst : f32 to vector<128x128xf32>
    %2 = arith.maximumf %0, %1 : vector<128x128xf32>
    %3 = math.absf %0 : vector<128x128xf32>
    %cst_1 = arith.constant 0.000000e+00 : f32
    %4 = vector.broadcast %cst_1 : f32 to vector<128x128xf32>
    %5 = arith.subf %4, %3 : vector<128x128xf32>
    %6 = math.exp %5 : vector<128x128xf32>
    %7 = math.log1p %6 : vector<128x128xf32>
    %8 = arith.addf %2, %7 : vector<128x128xf32>
    %cst_2 = arith.constant 0.693147182 : f32
    %9 = vector.broadcast %cst_2 : f32 to vector<128x128xf32>
    %10 = arith.subf %8, %9 : vector<128x128xf32>
    %c0_3 = arith.constant 0 : index
    %c0_4 = arith.constant 0 : index
    %11 = vector.load %arg3[%c0_3, %c0_4] : memref<128x128xf32, #tpu.memory_space<vmem>>, vector<128x128xf32>
    tpu.vector_store %arg3[%c0_3, %c0_4], %10 {strides = array<i32>} : memref<128x128xf32, #tpu.memory_space<vmem>>, vector<128x128xf32>,
    return
  }
  func.func @transform_0(%arg0: i32, %arg1: i32) -> (i32, i32) {
    %c0_i32 = arith.constant 0 : i32
    return %arg0, %arg1 : i32, i32
  }
  func.func @transform_1(%arg0: i32, %arg1: i32) -> (i32, i32) {
    %c0_i32 = arith.constant 0 : i32
    return %arg0, %arg1 : i32, i32
  }
}

</mosaic_0001>

<llo_original>
// kernel: tpu_custom_call.1
$region0: #{tpu_custom_call.1}
  #allocation0 [shape = 'u32[]', space=smem, size = 0x4, offset = 0x4, fixed_abs, tag = 'smem constant byte address 0x4 - core index']
  #allocation1 [shape = 'u32[144,128]{1,0:T(1,128)}', space=vmem, size = 0x12000, scoped, tag = 'internal scratch']
  %s0 = inlined_call_operand.hbm [shape: f32[128,128], index: 0, kind: input, shape index: {}]
  %s1 = inlined_call_operand.hbm [shape: f32[128,128], index: 1, kind: output, shape index: {}]
  %s2 = sld [smem:[#allocation0]]
  $region18: #{tpu_custom_call.1} parent=0
    _
  %s4 = ssub.s32 1, %s2
  %s5 = scalar_select 0, %s4, %s2
  $region1: #{tpu_custom_call.1} parent=0
    #allocation2 [shape = 'u8[65536]{0}', space=vmem, size = 0x10000, scoped, tag = 'input window, operand 0, single buffered']
    #allocation3 [shape = 's32[1]{0}', space=sflag, size = 0x4, scoped, tag = 'scoped memory for tpu_custom_call.1']
    #allocation4 [shape = 's32[1]{0}', space=sflag, size = 0x4, scoped, tag = 'scoped memory for tpu_custom_call.1']
    #allocation5 [shape = 'u8[65536]{0}', space=vmem, size = 0x10000, scoped, tag = 'output window, operand 0, single buffered']
    %6 = vsyncpa [#allocation3], 0
    %7 = vsyncpa [#allocation4], 0
    // Predicated region
    $region2: #{tpu_custom_call.1} parent=1 // pred_check
      _
    $region3: #{tpu_custom_call.1} parent=1 // pred_check_branch
      %9 = sbr.rel (0) target = $region5
    $region4: #{tpu_custom_call.1} parent=1 // pred_region
      %s11 = ssub.s32 2048, 2048
      %12 = vsyncadd [#allocation3], %s11
      %s13 = sshll.u32 [#allocation2], 4
      %s14 = int_to_ptr.vmem [resolvable:$true] %s13
      %19 = dma.hbm_to_vmem [thread:$0]  %s0, 2048, %s14, [#allocation3], 128, 128, 8
    $region5: #{tpu_custom_call.1} parent=1 // pred_fallthru
      _
    // Predicated region
    $region6: #{tpu_custom_call.1} parent=1 // pred_check
      _
    $region7: #{tpu_custom_call.1} parent=1 // pred_check_branch
      %21 = sbr.rel (0) target = $region9
    $region8: #{tpu_custom_call.1} parent=1 // pred_region
      %22 = dma.done [#allocation3], 2048
    $region9: #{tpu_custom_call.1} parent=1 // pred_fallthru
      _
    %v23 = vld [vmem:[#allocation2] sm:$0xff]
    %v24 = vld [vmem:[#allocation2 + $0x8] sm:$0xff]
    %v25 = vld [vmem:[#allocation2 + $0x10] sm:$0xff]
    %v26 = vld [vmem:[#allocation2 + $0x18] sm:$0xff]
    %v27 = vld [vmem:[#allocation2 + $0x20] sm:$0xff]
    %v28 = vld [vmem:[#allocation2 + $0x28] sm:$0xff]
    %v29 = vld [vmem:[#allocation2 + $0x30] sm:$0xff]
    %v30 = vld [vmem:[#allocation2 + $0x38] sm:$0xff]
    %v31 = vld [vmem:[#allocation2 + $0x40] sm:$0xff]
    %v32 = vld [vmem:[#allocation2 + $0x48] sm:$0xff]
    %v33 = vld [vmem:[#allocation2 + $0x50] sm:$0xff]
    %v34 = vld [vmem:[#allocation2 + $0x58] sm:$0xff]
    %v35 = vld [vmem:[#allocation2 + $0x60] sm:$0xff]
    %v36 = vld [vmem:[#allocation2 + $0x68] sm:$0xff]
    %v37 = vld [vmem:[#allocation2 + $0x70] sm:$0xff]
    %v38 = vld [vmem:[#allocation2 + $0x78] sm:$0xff]
    %v39 = vmax.f32 %v23, 0.0
    %v40 = vmax.f32 %v24, 0.0
    %v41 = vmax.f32 %v25, 0.0
    %v42 = vmax.f32 %v26, 0.0
    %v43 = vmax.f32 %v27, 0.0
    %v44 = vmax.f32 %v28, 0.0
    %v45 = vmax.f32 %v29, 0.0
    %v46 = vmax.f32 %v30, 0.0
    %v47 = vmax.f32 %v31, 0.0
    %v48 = vmax.f32 %v32, 0.0
    %v49 = vmax.f32 %v33, 0.0
    %v50 = vmax.f32 %v34, 0.0
    %v51 = vmax.f32 %v35, 0.0
    %v52 = vmax.f32 %v36, 0.0
    %v53 = vmax.f32 %v37, 0.0
    %v54 = vmax.f32 %v38, 0.0
    %v55 = vand.u32 2147483647, %v23
    %v56 = vand.u32 2147483647, %v24
    %v57 = vand.u32 2147483647, %v25
    %v58 = vand.u32 2147483647, %v26
    %v59 = vand.u32 2147483647, %v27
    %v60 = vand.u32 2147483647, %v28
    %v61 = vand.u32 2147483647, %v29
    %v62 = vand.u32 2147483647, %v30
    %v63 = vand.u32 2147483647, %v31
    %v64 = vand.u32 2147483647, %v32
    %v65 = vand.u32 2147483647, %v33
    %v66 = vand.u32 2147483647, %v34
    %v67 = vand.u32 2147483647, %v35
    %v68 = vand.u32 2147483647, %v36
    %v69 = vand.u32 2147483647, %v37
    %v70 = vand.u32 2147483647, %v38
    %v71 = vsub.f32 0.0, %v55
    %v72 = vsub.f32 0.0, %v56
    %v73 = vsub.f32 0.0, %v57
    %v74 = vsub.f32 0.0, %v58
    %v75 = vsub.f32 0.0, %v59
    %v76 = vsub.f32 0.0, %v60
    %v77 = vsub.f32 0.0, %v61
    %v78 = vsub.f32 0.0, %v62
    %v79 = vsub.f32 0.0, %v63
    %v80 = vsub.f32 0.0, %v64
    %v81 = vsub.f32 0.0, %v65
    %v82 = vsub.f32 0.0, %v66
    %v83 = vsub.f32 0.0, %v67
    %v84 = vsub.f32 0.0, %v68
    %v85 = vsub.f32 0.0, %v69
    %v86 = vsub.f32 0.0, %v70
    %v87 = vmul.f32 %v71, 1.442695
    %v88 = vpow.pop %v87
    %v89 = vmul.f32 %v72, 1.442695
    %v90 = vpow.pop %v89
    %v91 = vmul.f32 %v73, 1.442695
    %v92 = vpow.pop %v91
    %v93 = vmul.f32 %v74, 1.442695
    %v94 = vpow.pop %v93
    %v95 = vmul.f32 %v75, 1.442695
    %v96 = vpow.pop %v95
    %v97 = vmul.f32 %v76, 1.442695
    %v98 = vpow.pop %v97
    %v99 = vmul.f32 %v77, 1.442695
    %v100 = vpow.pop %v99
    %v101 = vmul.f32 %v78, 1.442695
    %v102 = vpow.pop %v101
    %v103 = vmul.f32 %v79, 1.442695
    %v104 = vpow.pop %v103
    %v105 = vmul.f32 %v80, 1.442695
    %v106 = vpow.pop %v105
    %v107 = vmul.f32 %v81, 1.442695
    %v108 = vpow.pop %v107
    %v109 = vmul.f32 %v82, 1.442695
    %v110 = vpow.pop %v109
    %v111 = vmul.f32 %v83, 1.442695
    %v112 = vpow.pop %v111
    %v113 = vmul.f32 %v84, 1.442695
    %v114 = vpow.pop %v113
    %v115 = vmul.f32 %v85, 1.442695
    %v116 = vpow.pop %v115
    %v117 = vmul.f32 %v86, 1.442695
    %v118 = vpow.pop %v117
    %v119 = vadd.f32 %v88, 1.0
    %v120 = vlog2.pop %v119
    %v121 = vmul.f32 %v120, 0.6931472
    %v122 = vmul.f32 -0.5, %v88
    %v123 = vadd.f32 %v122, 1.0
    %v124 = vmul.f32 %v123, %v88
    %v125 = vand.u32 2147483647, %v88
    %vm126 = vcmp.lt.f32.partialorder %v125, 0.0004427343
    %v127 = vsel %vm126, %v124, %v121
    %v128 = vadd.f32 %v90, 1.0
    %v129 = vlog2.pop %v128
    %v130 = vmul.f32 %v129, 0.6931472
    %v131 = vmul.f32 -0.5, %v90
    %v132 = vadd.f32 %v131, 1.0
    %v133 = vmul.f32 %v132, %v90
    %v134 = vand.u32 2147483647, %v90
    %vm135 = vcmp.lt.f32.partialorder %v134, 0.0004427343
    %v136 = vsel %vm135, %v133, %v130
    %v137 = vadd.f32 %v92, 1.0
    %v138 = vlog2.pop %v137
    %v139 = vmul.f32 %v138, 0.6931472
    %v140 = vmul.f32 -0.5, %v92
    %v141 = vadd.f32 %v140, 1.0
    %v142 = vmul.f32 %v141, %v92
    %v143 = vand.u32 2147483647, %v92
    %vm144 = vcmp.lt.f32.partialorder %v143, 0.0004427343
    %v145 = vsel %vm144, %v142, %v139
    %v146 = vadd.f32 %v94, 1.0
    %v147 = vlog2.pop %v146
    %v148 = vmul.f32 %v147, 0.6931472
    %v149 = vmul.f32 -0.5, %v94
    %v150 = vadd.f32 %v149, 1.0
    %v151 = vmul.f32 %v150, %v94
    %v152 = vand.u32 2147483647, %v94
    %vm153 = vcmp.lt.f32.partialorder %v152, 0.0004427343
    %v154 = vsel %vm153, %v151, %v148
    %v155 = vadd.f32 %v96, 1.0
    %v156 = vlog2.pop %v155
    %v157 = vmul.f32 %v156, 0.6931472
    %v158 = vmul.f32 -0.5, %v96
    %v159 = vadd.f32 %v158, 1.0
    %v160 = vmul.f32 %v159, %v96
    %v161 = vand.u32 2147483647, %v96
    %vm162 = vcmp.lt.f32.partialorder %v161, 0.0004427343
    %v163 = vsel %vm162, %v160, %v157
    %v164 = vadd.f32 %v98, 1.0
    %v165 = vlog2.pop %v164
    %v166 = vmul.f32 %v165, 0.6931472
    %v167 = vmul.f32 -0.5, %v98
    %v168 = vadd.f32 %v167, 1.0
    %v169 = vmul.f32 %v168, %v98
    %v170 = vand.u32 2147483647, %v98
    %vm171 = vcmp.lt.f32.partialorder %v170, 0.0004427343
    %v172 = vsel %vm171, %v169, %v166
    %v173 = vadd.f32 %v100, 1.0
    %v174 = vlog2.pop %v173
    %v175 = vmul.f32 %v174, 0.6931472
    %v176 = vmul.f32 -0.5, %v100
    %v177 = vadd.f32 %v176, 1.0
    %v178 = vmul.f32 %v177, %v100
    %v179 = vand.u32 2147483647, %v100
    %vm180 = vcmp.lt.f32.partialorder %v179, 0.0004427343
    %v181 = vsel %vm180, %v178, %v175
    %v182 = vadd.f32 %v102, 1.0
    %v183 = vlog2.pop %v182
    %v184 = vmul.f32 %v183, 0.6931472
    %v185 = vmul.f32 -0.5, %v102
    %v186 = vadd.f32 %v185, 1.0
    %v187 = vmul.f32 %v186, %v102
    %v188 = vand.u32 2147483647, %v102
    %vm189 = vcmp.lt.f32.partialorder %v188, 0.0004427343
    %v190 = vsel %vm189, %v187, %v184
    %v191 = vadd.f32 %v104, 1.0
    %v192 = vlog2.pop %v191
    %v193 = vmul.f32 %v192, 0.6931472
    %v194 = vmul.f32 -0.5, %v104
    %v195 = vadd.f32 %v194, 1.0
    %v196 = vmul.f32 %v195, %v104
    %v197 = vand.u32 2147483647, %v104
    %vm198 = vcmp.lt.f32.partialorder %v197, 0.0004427343
    %v199 = vsel %vm198, %v196, %v193
    %v200 = vadd.f32 %v106, 1.0
    %v201 = vlog2.pop %v200
    %v202 = vmul.f32 %v201, 0.6931472
    %v203 = vmul.f32 -0.5, %v106
    %v204 = vadd.f32 %v203, 1.0
    %v205 = vmul.f32 %v204, %v106
    %v206 = vand.u32 2147483647, %v106
    %vm207 = vcmp.lt.f32.partialorder %v206, 0.0004427343
    %v208 = vsel %vm207, %v205, %v202
    %v209 = vadd.f32 %v108, 1.0
    %v210 = vlog2.pop %v209
    %v211 = vmul.f32 %v210, 0.6931472
    %v212 = vmul.f32 -0.5, %v108
    %v213 = vadd.f32 %v212, 1.0
    %v214 = vmul.f32 %v213, %v108
    %v215 = vand.u32 2147483647, %v108
    %vm216 = vcmp.lt.f32.partialorder %v215, 0.0004427343
    %v217 = vsel %vm216, %v214, %v211
    %v218 = vadd.f32 %v110, 1.0
    %v219 = vlog2.pop %v218
    %v220 = vmul.f32 %v219, 0.6931472
    %v221 = vmul.f32 -0.5, %v110
    %v222 = vadd.f32 %v221, 1.0
    %v223 = vmul.f32 %v222, %v110
    %v224 = vand.u32 2147483647, %v110
    %vm225 = vcmp.lt.f32.partialorder %v224, 0.0004427343
    %v226 = vsel %vm225, %v223, %v220
    %v227 = vadd.f32 %v112, 1.0
    %v228 = vlog2.pop %v227
    %v229 = vmul.f32 %v228, 0.6931472
    %v230 = vmul.f32 -0.5, %v112
    %v231 = vadd.f32 %v230, 1.0
    %v232 = vmul.f32 %v231, %v112
    %v233 = vand.u32 2147483647, %v112
    %vm234 = vcmp.lt.f32.partialorder %v233, 0.0004427343
    %v235 = vsel %vm234, %v232, %v229
    %v236 = vadd.f32 %v114, 1.0
    %v237 = vlog2.pop %v236
    %v238 = vmul.f32 %v237, 0.6931472
    %v239 = vmul.f32 -0.5, %v114
    %v240 = vadd.f32 %v239, 1.0
    %v241 = vmul.f32 %v240, %v114
    %v242 = vand.u32 2147483647, %v114
    %vm243 = vcmp.lt.f32.partialorder %v242, 0.0004427343
    %v244 = vsel %vm243, %v241, %v238
    %v245 = vadd.f32 %v116, 1.0
    %v246 = vlog2.pop %v245
    %v247 = vmul.f32 %v246, 0.6931472
    %v248 = vmul.f32 -0.5, %v116
    %v249 = vadd.f32 %v248, 1.0
    %v250 = vmul.f32 %v249, %v116
    %v251 = vand.u32 2147483647, %v116
    %vm252 = vcmp.lt.f32.partialorder %v251, 0.0004427343
    %v253 = vsel %vm252, %v250, %v247
    %v254 = vadd.f32 %v118, 1.0
    %v255 = vlog2.pop %v254
    %v256 = vmul.f32 %v255, 0.6931472
    %v257 = vmul.f32 -0.5, %v118
    %v258 = vadd.f32 %v257, 1.0
    %v259 = vmul.f32 %v258, %v118
    %v260 = vand.u32 2147483647, %v118
    %vm261 = vcmp.lt.f32.partialorder %v260, 0.0004427343
    %v262 = vsel %vm261, %v259, %v256
    %v263 = vadd.f32 %v39, %v127
    %v264 = vadd.f32 %v40, %v136
    %v265 = vadd.f32 %v41, %v145
    %v266 = vadd.f32 %v42, %v154
    %v267 = vadd.f32 %v43, %v163
    %v268 = vadd.f32 %v44, %v172
    %v269 = vadd.f32 %v45, %v181
    %v270 = vadd.f32 %v46, %v190
    %v271 = vadd.f32 %v47, %v199
    %v272 = vadd.f32 %v48, %v208
    %v273 = vadd.f32 %v49, %v217
    %v274 = vadd.f32 %v50, %v226
    %v275 = vadd.f32 %v51, %v235
    %v276 = vadd.f32 %v52, %v244
    %v277 = vadd.f32 %v53, %v253
    %v278 = vadd.f32 %v54, %v262
    %v279 = vsub.f32 %v263, 0.6931472
    %v280 = vsub.f32 %v264, 0.6931472
    %v281 = vsub.f32 %v265, 0.6931472
    %v282 = vsub.f32 %v266, 0.6931472
    %v283 = vsub.f32 %v267, 0.6931472
    %v284 = vsub.f32 %v268, 0.6931472
    %v285 = vsub.f32 %v269, 0.6931472
    %v286 = vsub.f32 %v270, 0.6931472
    %v287 = vsub.f32 %v271, 0.6931472
    %v288 = vsub.f32 %v272, 0.6931472
    %v289 = vsub.f32 %v273, 0.6931472
    %v290 = vsub.f32 %v274, 0.6931472
    %v291 = vsub.f32 %v275, 0.6931472
    %v292 = vsub.f32 %v276, 0.6931472
    %v293 = vsub.f32 %v277, 0.6931472
    %v294 = vsub.f32 %v278, 0.6931472
    %295 = vst [vmem:[#allocation5] sm:$0xff] %v279
    %296 = vst [vmem:[#allocation5 + $0x8] sm:$0xff] %v280
    %297 = vst [vmem:[#allocation5 + $0x10] sm:$0xff] %v281
    %298 = vst [vmem:[#allocation5 + $0x18] sm:$0xff] %v282
    %299 = vst [vmem:[#allocation5 + $0x20] sm:$0xff] %v283
    %300 = vst [vmem:[#allocation5 + $0x28] sm:$0xff] %v284
    %301 = vst [vmem:[#allocation5 + $0x30] sm:$0xff] %v285
    %302 = vst [vmem:[#allocation5 + $0x38] sm:$0xff] %v286
    %303 = vst [vmem:[#allocation5 + $0x40] sm:$0xff] %v287
    %304 = vst [vmem:[#allocation5 + $0x48] sm:$0xff] %v288
    %305 = vst [vmem:[#allocation5 + $0x50] sm:$0xff] %v289
    %306 = vst [vmem:[#allocation5 + $0x58] sm:$0xff] %v290
    %307 = vst [vmem:[#allocation5 + $0x60] sm:$0xff] %v291
    %308 = vst [vmem:[#allocation5 + $0x68] sm:$0xff] %v292
    %309 = vst [vmem:[#allocation5 + $0x70] sm:$0xff] %v293
    %310 = vst [vmem:[#allocation5 + $0x78] sm:$0xff] %v294
    // Predicated region
    $region10: #{tpu_custom_call.1} parent=1 // pred_check
      _
    $region11: #{tpu_custom_call.1} parent=1 // pred_check_branch
      %312 = sbr.rel (0) target = $region13
    $region12: #{tpu_custom_call.1} parent=1 // pred_region
      %s314 = ssub.s32 2048, 2048
      %315 = vsyncadd [#allocation4], %s314
      %s316 = sshll.u32 [#allocation5], 4
      %s317 = int_to_ptr.vmem [resolvable:$true] %s316
      %322 = dma.vmem_to_hbm [thread:$0]  %s317, 2048, %s1, [#allocation4], 128, 128, 8
    $region13: #{tpu_custom_call.1} parent=1 // pred_fallthru
      _
    // Predicated region
    $region14: #{tpu_custom_call.1} parent=1 // pred_check
      _
    $region15: #{tpu_custom_call.1} parent=1 // pred_check_branch
      %324 = sbr.rel (0) target = $region17
    $region16: #{tpu_custom_call.1} parent=1 // pred_region
      %325 = dma.done [#allocation4], 2048
    $region17: #{tpu_custom_call.1} parent=1 // pred_fallthru
      _
    %326 = vsyncpa [#allocation3], 1
    %327 = vsyncpa [#allocation4], 1

</llo_original>
